<compile_context>
chip_gen: v7x
topology: tpu7x:2x2x1
jax: 0.10.0
libtpu: 0.0.40
codegen_flags: <defaults>
</compile_context>

<pallas_src>
import jax
import jax.numpy as jnp
from jax.experimental import pallas as pl
from jax.experimental.pallas import tpu as pltpu


def colored_net_kernel(adj_ref, feat_ref, pw_ref, vecs_ref, mats_ref,
                       out_ref, hcat_ref):
    a = adj_ref[0]                                   # [n, n] bf16 (0/1)
    x = feat_ref[0]                                  # [n, 1] f32

    # ---- unpack packed row-vector slab [8, 128] ----
    V = vecs_ref[...]                                # one dense vreg load
    w1r = V[0:1, 0:64]                               # GraphConv1 lin_rel weight [1,64]
    w1s = V[1:2, 0:64]                               # GraphConv1 lin_root weight [1,64]
    b1 = V[2:3, 0:64]
    b2 = V[3:4, 0:32]
    b3 = V[4:5, 0:16]
    b4 = V[5:6, 0:8]
    b5 = V[6:7, 0:1]

    # ---- GraphConv(1 -> 64): lin_rel(A @ x) + lin_root(x), bias on lin_rel ----
    agg = jnp.dot(a, x.astype(jnp.bfloat16),
                  preferred_element_type=jnp.float32)            # [n, 1] f32
    # in_features == 1: the K=1 "matmuls" are lane broadcasts on the VPU (f32)
    h = agg * w1r + x * w1s + b1                                 # [n, 64]
    h = jnp.maximum(h, 0.0)                                      # ReLU; Dropout(0.2) = identity

    # ---- GraphConv(64 -> 32), fused: [A@h | h] @ [w2r ; w2s] + b2 ----
    agg2 = jnp.dot(a, h.astype(jnp.bfloat16),
                   preferred_element_type=jnp.float32)           # [n, 64] f32
    hcat_ref[:, 0:64] = agg2                                     # concat via VMEM scratch
    hcat_ref[:, 64:128] = h
    w2 = mats_ref[0:128, 0:32]                                   # [w2r ; w2s] stacked
    h2 = jnp.dot(hcat_ref[...], w2,
                 preferred_element_type=jnp.float32) + b2        # single K=128 MXU pass
    h2 = jnp.maximum(h2, 0.0)                                    # ReLU; Dropout(0.2) = identity

    # ---- MLP: 32 -> 16 -> 8 -> 1 (Dropouts identity in eval) ----
    w3 = mats_ref[128:160, 0:16]
    w4 = mats_ref[160:176, 0:8]
    w5 = mats_ref[176:184, 0:1]
    m = jnp.maximum(jnp.dot(h2, w3, preferred_element_type=jnp.float32) + b3, 0.0)
    m = jnp.maximum(jnp.dot(m, w4, preferred_element_type=jnp.float32) + b4, 0.0)
    m = jnp.dot(m, w5, preferred_element_type=jnp.float32) + b5  # [n, 1]

    # ---- global_mean_pool (per-graph weights) + sigmoid, lane-dense store ----
    pooled = jnp.dot(pw_ref[0], m, preferred_element_type=jnp.float32)   # [1, 1]
    out_ref[...] = jax.nn.sigmoid(jnp.broadcast_to(pooled, (1, 1, 128)))


def pack_params(params):
    """Pack the 13 tiny tensors into two (8,128)-aligned VMEM slabs."""
    (w1r, w1s, b1, w2r, w2s, b2, w3, b3, w4, b4, w5, b5) = params
    vecs = jnp.zeros((8, 128), jnp.float32)
    vecs = vecs.at[0, :64].set(w1r[0])
    vecs = vecs.at[1, :64].set(w1s[0])
    vecs = vecs.at[2, :64].set(b1[0])
    vecs = vecs.at[3, :32].set(b2[0])
    vecs = vecs.at[4, :16].set(b3[0])
    vecs = vecs.at[5, :8].set(b4[0])
    vecs = vecs.at[6, :1].set(b5[0])

    mats = jnp.zeros((192, 128), jnp.float32)
    mats = mats.at[0:64, 0:32].set(w2r)       # fused layer-2 weight [w2r ; w2s]
    mats = mats.at[64:128, 0:32].set(w2s)
    mats = mats.at[128:160, 0:16].set(w3)
    mats = mats.at[160:176, 0:8].set(w4)
    mats = mats.at[176:184, 0:1].set(w5)
    return vecs, mats


def colored_net_forward(feat, adj, pw, params):
    """feat [G,n,1] f32, adj [G,n,n] (0/1), pw [G,1,n] mean-pool weights. Returns [G]."""
    G, n, _ = adj.shape
    vecs, mats = pack_params(params)
    adj_bf16 = adj.astype(jnp.bfloat16)       # exact for 0/1 entries

    out = pl.pallas_call(
        colored_net_kernel,
        out_shape=jax.ShapeDtypeStruct((G, 1, 128), jnp.float32),
        grid_spec=pltpu.PrefetchScalarGridSpec(
            num_scalar_prefetch=0,
            grid=(G,),
            in_specs=[
                pl.BlockSpec((1, n, n), lambda g: (g, 0, 0)),    # adj (bf16)
                pl.BlockSpec((1, n, 1), lambda g: (g, 0, 0)),    # feat
                pl.BlockSpec((1, 1, n), lambda g: (g, 0, 0)),    # pool weights
                pl.BlockSpec((8, 128), lambda g: (0, 0)),        # packed vectors (resident)
                pl.BlockSpec((192, 128), lambda g: (0, 0)),      # packed matrices (resident)
            ],
            out_specs=pl.BlockSpec((1, 1, 128), lambda g: (g, 0, 0)),
            scratch_shapes=[pltpu.VMEM((n, 128), jnp.float32)],  # [agg2 | h] concat buffer
        ),
        compiler_params=pltpu.CompilerParams(
            dimension_semantics=("parallel",),
            vmem_limit_bytes=32 * 1024 * 1024,
        ),
    )(adj_bf16, feat, pw, vecs, mats)
    # torch .squeeze(): returns a scalar if G == 1; here we keep shape [G].
    return out[:, 0, 0]


def reference_forward(feat, adj, pw, params):
    """Pure-JAX f32 reference of the module's forward pass (eval mode)."""
    (w1r, w1s, b1, w2r, w2s, b2, w3, b3, w4, b4, w5, b5) = params

    def one(a, x, p):
        h = jnp.maximum((a @ x) @ w1r + x @ w1s + b1, 0.0)
        h2 = jnp.maximum((a @ h) @ w2r + h @ w2s + b2, 0.0)
        m = jnp.maximum(h2 @ w3 + b3, 0.0)
        m = jnp.maximum(m @ w4 + b4, 0.0)
        m = m @ w5 + b5
        return jax.nn.sigmoid((p @ m)[0, 0])

    return jax.vmap(one)(adj, feat, pw)


def init_params(key):
    """Deterministic synthetic weights matching the module's layer shapes.
    GraphConv(i, o): W_rel [i, o], W_root [i, o], bias [1, o] (bias on lin_rel)."""
    def lin(k, fi, fo, scale=0.1):
        kw, kb = jax.random.split(k)
        w = jax.random.normal(kw, (fi, fo), jnp.float32) * scale
        b = jax.random.normal(kb, (1, fo), jnp.float32) * scale
        return w, b

    ks = jax.random.split(key, 7)
    w1r, b1 = lin(ks[0], 1, 64)
    w1s, _ = lin(ks[1], 1, 64)      # root weight, no bias
    w2r, b2 = lin(ks[2], 64, 32)
    w2s, _ = lin(ks[3], 64, 32)
    w3, b3 = lin(ks[4], 32, 16)
    w4, b4 = lin(ks[5], 16, 8)
    w5, b5 = lin(ks[6], 8, 1)
    return (w1r, w1s, b1, w2r, w2s, b2, w3, b3, w4, b4, w5, b5)


def build_graphs(G, n):
    """G undirected ring graphs of n nodes each; graph 1 gets an extra chord.
    Returns adj [G,n,n] (adj[g,i,j]=1 iff edge j->i) and mean-pool weights pw [G,1,n]."""
    idx = jnp.arange(n)
    nxt = (idx + 1) % n
    A = jnp.zeros((n, n), jnp.float32)
    A = A.at[nxt, idx].set(1.0)
    A = A.at[idx, nxt].set(1.0)
    adj = jnp.tile(A[None], (G, 1, 1))
    if G > 1:
        adj = adj.at[1, 0, n // 2].set(1.0)
        adj = adj.at[1, n // 2, 0].set(1.0)
    pw = jnp.full((G, 1, n), 1.0 / n, jnp.float32)
    return adj, pw


if __name__ == "__main__":
    G, n = 2, 32                                   # 2 graphs x 32 nodes = 64 nodes total
    key = jax.random.PRNGKey(0)
    k_feat, k_params = jax.random.split(key)

    feat = jax.random.normal(k_feat, (G, n, 1), jnp.float32)
    adj, pw = build_graphs(G, n)
    params = init_params(k_params)

    out = colored_net_forward(feat, adj, pw, params)
    jax.block_until_ready(out)
    assert out.shape == (G,)

    ref = reference_forward(feat, adj, pw, params)
    assert jnp.allclose(out, ref, atol=5e-2), (out, ref)   # bf16 aggregation tolerance
    print("KERNEL_OK")
</pallas_src>

<mosaic_0001>
module attributes {stable_mosaic.version = 11 : i64} {
  func.func @colored_net_kernel(%arg0: i32, %arg1: memref<1x32x32xbf16, #tpu.memory_space<vmem>>, %arg2: memref<1x32x1xf32, #tpu.memory_space<vmem>>, %arg3: memref<1x1x32xf32, #tpu.memory_space<vmem>>, %arg4: memref<8x128xf32, #tpu.memory_space<vmem>>, %arg5: memref<192x128xf32, #tpu.memory_space<vmem>>, %arg6: memref<1x1x128xf32, #tpu.memory_space<vmem>>, %arg7: memref<32x128xf32, #tpu.memory_space<vmem>>) attributes {dimension_semantics = [#tpu.dimension_semantics<parallel>], iteration_bounds = array<i64: 2>, scalar_prefetch = 0 : i64, scratch_operands = 1 : i64, tpu.core_type = #tpu.core_type<tc>, window_params = [{transform_indices = @transform_0, window_bounds = array<i64: 1, 32, 32>}, {transform_indices = @transform_1, window_bounds = array<i64: 1, 32, 1>}, {transform_indices = @transform_2, window_bounds = array<i64: 1, 1, 32>}, {pipeline_mode = #tpu.pipeline_mode<synchronous>, transform_indices = @transform_3, window_bounds = array<i64: 8, 128>}, {pipeline_mode = #tpu.pipeline_mode<synchronous>, transform_indices = @transform_4, window_bounds = array<i64: 192, 128>}, {transform_indices = @transform_5, window_bounds = array<i64: 1, 1, 128>}]} {
    %c0 = arith.constant 0 : index
    %c0_0 = arith.constant 0 : index
    %c0_1 = arith.constant 0 : index
    %0 = vector.load %arg1[%c0, %c0_0, %c0_1] : memref<1x32x32xbf16, #tpu.memory_space<vmem>>, vector<1x32x32xbf16>
    %1 = vector.shape_cast %0 : vector<1x32x32xbf16> to vector<32x32xbf16>
    %c0_2 = arith.constant 0 : index
    %c0_3 = arith.constant 0 : index
    %c0_4 = arith.constant 0 : index
    %2 = vector.load %arg2[%c0_2, %c0_3, %c0_4] : memref<1x32x1xf32, #tpu.memory_space<vmem>>, vector<1x32x1xf32>
    %3 = vector.shape_cast %2 : vector<1x32x1xf32> to vector<32x1xf32>
    %c0_5 = arith.constant 0 : index
    %c0_6 = arith.constant 0 : index
    %4 = vector.load %arg4[%c0_5, %c0_6] : memref<8x128xf32, #tpu.memory_space<vmem>>, vector<8x128xf32>
    %5 = vector.extract_strided_slice %4 {offsets = [0, 0], sizes = [1, 64], strides = [1, 1]} : vector<8x128xf32> to vector<1x64xf32>
    %6 = vector.extract_strided_slice %4 {offsets = [1, 0], sizes = [1, 64], strides = [1, 1]} : vector<8x128xf32> to vector<1x64xf32>
    %7 = vector.extract_strided_slice %4 {offsets = [2, 0], sizes = [1, 64], strides = [1, 1]} : vector<8x128xf32> to vector<1x64xf32>
    %8 = vector.extract_strided_slice %4 {offsets = [3, 0], sizes = [1, 32], strides = [1, 1]} : vector<8x128xf32> to vector<1x32xf32>
    %9 = vector.extract_strided_slice %4 {offsets = [4, 0], sizes = [1, 16], strides = [1, 1]} : vector<8x128xf32> to vector<1x16xf32>
    %10 = vector.extract_strided_slice %4 {offsets = [5, 0], sizes = [1, 8], strides = [1, 1]} : vector<8x128xf32> to vector<1x8xf32>
    %11 = vector.extract_strided_slice %4 {offsets = [6, 0], sizes = [1, 1], strides = [1, 1]} : vector<8x128xf32> to vector<1x1xf32>
    %12 = arith.truncf %3 : vector<32x1xf32> to vector<32x1xbf16>
    %cst = arith.constant dense<0.000000e+00> : vector<32x1xf32>
    %13 = tpu.matmul %1, %12, %cst {dimension_numbers = #tpu.dot_dimension_numbers<[1], [0], [0], [1], [0, 0, 1, 1], [], []>} : vector<32x32xbf16>, vector<32x1xbf16>, vector<32x1xf32> -> vector<32x1xf32>
    %14 = vector.broadcast %13 : vector<32x1xf32> to vector<32x64xf32>
    %15 = vector.broadcast %5 : vector<1x64xf32> to vector<32x64xf32>
    %16 = arith.mulf %14, %15 : vector<32x64xf32>
    %17 = vector.broadcast %3 : vector<32x1xf32> to vector<32x64xf32>
    %18 = vector.broadcast %6 : vector<1x64xf32> to vector<32x64xf32>
    %19 = arith.mulf %17, %18 : vector<32x64xf32>
    %20 = arith.addf %16, %19 : vector<32x64xf32>
    %21 = vector.broadcast %7 : vector<1x64xf32> to vector<32x64xf32>
    %22 = arith.addf %20, %21 : vector<32x64xf32>
    %cst_7 = arith.constant 0.000000e+00 : f32
    %23 = vector.broadcast %cst_7 : f32 to vector<32x64xf32>
    %24 = arith.maximumf %22, %23 : vector<32x64xf32>
    %25 = arith.truncf %24 : vector<32x64xf32> to vector<32x64xbf16>
    %cst_8 = arith.constant dense<0.000000e+00> : vector<32x64xf32>
    %26 = tpu.matmul %1, %25, %cst_8 {dimension_numbers = #tpu.dot_dimension_numbers<[1], [0], [0], [1], [0, 0, 1, 1], [], []>} : vector<32x32xbf16>, vector<32x64xbf16>, vector<32x64xf32> -> vector<32x64xf32>
    %c0_9 = arith.constant 0 : index
    %c0_10 = arith.constant 0 : index
    %27 = vector.load %arg7[%c0_9, %c0_10] : memref<32x128xf32, #tpu.memory_space<vmem>>, vector<32x64xf32>
    tpu.vector_store %arg7[%c0_9, %c0_10], %26 {strides = array<i32>} : memref<32x128xf32, #tpu.memory_space<vmem>>, vector<32x64xf32>,
    %c0_11 = arith.constant 0 : index
    %c64 = arith.constant 64 : index
    %28 = vector.load %arg7[%c0_11, %c64] : memref<32x128xf32, #tpu.memory_space<vmem>>, vector<32x64xf32>
    tpu.vector_store %arg7[%c0_11, %c64], %24 {strides = array<i32>} : memref<32x128xf32, #tpu.memory_space<vmem>>, vector<32x64xf32>,
    %c0_12 = arith.constant 0 : index
    %c0_13 = arith.constant 0 : index
    %29 = vector.load %arg5[%c0_12, %c0_13] : memref<192x128xf32, #tpu.memory_space<vmem>>, vector<128x32xf32>
    %c0_14 = arith.constant 0 : index
    %c0_15 = arith.constant 0 : index
    %30 = vector.load %arg7[%c0_14, %c0_15] : memref<32x128xf32, #tpu.memory_space<vmem>>, vector<32x128xf32>
    %cst_16 = arith.constant dense<0.000000e+00> : vector<32x32xf32>
    %31 = tpu.matmul %30, %29, %cst_16 {dimension_numbers = #tpu.dot_dimension_numbers<[1], [0], [0], [1], [0, 0, 1, 1], [], []>} : vector<32x128xf32>, vector<128x32xf32>, vector<32x32xf32> -> vector<32x32xf32>
    %32 = vector.broadcast %8 : vector<1x32xf32> to vector<32x32xf32>
    %33 = arith.addf %31, %32 : vector<32x32xf32>
    %cst_17 = arith.constant 0.000000e+00 : f32
    %34 = vector.broadcast %cst_17 : f32 to vector<32x32xf32>
    %35 = arith.maximumf %33, %34 : vector<32x32xf32>
    %c128 = arith.constant 128 : index
    %c0_18 = arith.constant 0 : index
    %36 = vector.load %arg5[%c128, %c0_18] : memref<192x128xf32, #tpu.memory_space<vmem>>, vector<32x16xf32>
    %c160 = arith.constant 160 : index
    %c0_19 = arith.constant 0 : index
    %37 = vector.load %arg5[%c160, %c0_19] : memref<192x128xf32, #tpu.memory_space<vmem>>, vector<16x8xf32>
    %c176 = arith.constant 176 : index
    %c0_20 = arith.constant 0 : index
    %38 = vector.load %arg5[%c176, %c0_20] : memref<192x128xf32, #tpu.memory_space<vmem>>, vector<8x1xf32>
    %cst_21 = arith.constant dense<0.000000e+00> : vector<32x16xf32>
    %39 = tpu.matmul %35, %36, %cst_21 {dimension_numbers = #tpu.dot_dimension_numbers<[1], [0], [0], [1], [0, 0, 1, 1], [], []>} : vector<32x32xf32>, vector<32x16xf32>, vector<32x16xf32> -> vector<32x16xf32>
    %40 = vector.broadcast %9 : vector<1x16xf32> to vector<32x16xf32>
    %41 = arith.addf %39, %40 : vector<32x16xf32>
    %cst_22 = arith.constant 0.000000e+00 : f32
    %42 = vector.broadcast %cst_22 : f32 to vector<32x16xf32>
    %43 = arith.maximumf %41, %42 : vector<32x16xf32>
    %cst_23 = arith.constant dense<0.000000e+00> : vector<32x8xf32>
    %44 = tpu.matmul %43, %37, %cst_23 {dimension_numbers = #tpu.dot_dimension_numbers<[1], [0], [0], [1], [0, 0, 1, 1], [], []>} : vector<32x16xf32>, vector<16x8xf32>, vector<32x8xf32> -> vector<32x8xf32>
    %45 = vector.broadcast %10 : vector<1x8xf32> to vector<32x8xf32>
    %46 = arith.addf %44, %45 : vector<32x8xf32>
    %cst_24 = arith.constant 0.000000e+00 : f32
    %47 = vector.broadcast %cst_24 : f32 to vector<32x8xf32>
    %48 = arith.maximumf %46, %47 : vector<32x8xf32>
    %cst_25 = arith.constant dense<0.000000e+00> : vector<32x1xf32>
    %49 = tpu.matmul %48, %38, %cst_25 {dimension_numbers = #tpu.dot_dimension_numbers<[1], [0], [0], [1], [0, 0, 1, 1], [], []>} : vector<32x8xf32>, vector<8x1xf32>, vector<32x1xf32> -> vector<32x1xf32>
    %50 = vector.broadcast %11 : vector<1x1xf32> to vector<32x1xf32>
    %51 = arith.addf %49, %50 : vector<32x1xf32>
    %c0_26 = arith.constant 0 : index
    %c0_27 = arith.constant 0 : index
    %c0_28 = arith.constant 0 : index
    %52 = vector.load %arg3[%c0_26, %c0_27, %c0_28] : memref<1x1x32xf32, #tpu.memory_space<vmem>>, vector<1x1x32xf32>
    %53 = vector.shape_cast %52 : vector<1x1x32xf32> to vector<1x32xf32>
    %cst_29 = arith.constant dense<0.000000e+00> : vector<1x1xf32>
    %54 = tpu.matmul %53, %51, %cst_29 {dimension_numbers = #tpu.dot_dimension_numbers<[1], [0], [0], [1], [0, 0, 1, 1], [], []>} : vector<1x32xf32>, vector<32x1xf32>, vector<1x1xf32> -> vector<1x1xf32>
    %55 = vector.shape_cast %54 : vector<1x1xf32> to vector<1x1x1xf32>
    %56 = vector.broadcast %55 : vector<1x1x1xf32> to vector<1x1x128xf32>
    %57 = arith.negf %56 : vector<1x1x128xf32>
    %58 = math.exp %57 : vector<1x1x128xf32>
    %cst_30 = arith.constant 1.000000e+00 : f32
    %59 = vector.broadcast %cst_30 : f32 to vector<1x1x128xf32>
    %60 = arith.addf %59, %58 : vector<1x1x128xf32>
    %61 = arith.divf %59, %60 : vector<1x1x128xf32>
    %c0_31 = arith.constant 0 : index
    %c0_32 = arith.constant 0 : index
    %c0_33 = arith.constant 0 : index
    %62 = vector.load %arg6[%c0_31, %c0_32, %c0_33] : memref<1x1x128xf32, #tpu.memory_space<vmem>>, vector<1x1x128xf32>
    tpu.vector_store %arg6[%c0_31, %c0_32, %c0_33], %61 {strides = array<i32>} : memref<1x1x128xf32, #tpu.memory_space<vmem>>, vector<1x1x128xf32>,
    return
  }
  func.func @transform_0(%arg0: i32) -> (i32, i32, i32) {
    %c0_i32 = arith.constant 0 : i32
    %c0_i32_0 = arith.constant 0 : i32
    %c0_i32_1 = arith.constant 0 : i32
    return %arg0, %c0_i32, %c0_i32_0 : i32, i32, i32
  }
  func.func @transform_1(%arg0: i32) -> (i32, i32, i32) {
    %c0_i32 = arith.constant 0 : i32
    %c0_i32_0 = arith.constant 0 : i32
    %c0_i32_1 = arith.constant 0 : i32
    return %arg0, %c0_i32, %c0_i32_0 : i32, i32, i32
  }
  func.func @transform_2(%arg0: i32) -> (i32, i32, i32) {
    %c0_i32 = arith.constant 0 : i32
    %c0_i32_0 = arith.constant 0 : i32
    %c0_i32_1 = arith.constant 0 : i32
    return %arg0, %c0_i32, %c0_i32_0 : i32, i32, i32
  }
  func.func @transform_3(%arg0: i32) -> (i32, i32) {
    %c0_i32 = arith.constant 0 : i32
    %c0_i32_0 = arith.constant 0 : i32
    %c0_i32_1 = arith.constant 0 : i32
    return %c0_i32, %c0_i32_0 : i32, i32
  }
  func.func @transform_4(%arg0: i32) -> (i32, i32) {
    %c0_i32 = arith.constant 0 : i32
    %c0_i32_0 = arith.constant 0 : i32
    %c0_i32_1 = arith.constant 0 : i32
    return %c0_i32, %c0_i32_0 : i32, i32
  }
  func.func @transform_5(%arg0: i32) -> (i32, i32, i32) {
    %c0_i32 = arith.constant 0 : i32
    %c0_i32_0 = arith.constant 0 : i32
    %c0_i32_1 = arith.constant 0 : i32
    return %arg0, %c0_i32, %c0_i32_0 : i32, i32, i32
  }
}

</mosaic_0001>

<llo_original>
// kernel: tpu_custom_call.1
$region0: #{tpu_custom_call.1}
  #allocation0 [shape = 'u32[]', space=smem, size = 0x4, offset = 0x4, fixed_abs, tag = 'smem constant byte address 0x4 - core index']
  #allocation1 [shape = 'u32[144,128]{1,0:T(1,128)}', space=vmem, size = 0x12000, scoped, tag = 'internal scratch']
  #allocation2 [shape = 'f32[32,128]{1,0:T(8,128)}', space=vmem, size = 0x4000, scoped, tag = 'scratch operand']
  %s0 = inlined_call_operand.vmem [shape: bf16[2,32,32], index: 0, kind: input, shape index: {}]
  %s1 = inlined_call_operand.vmem [shape: f32[2,32,1], index: 1, kind: input, shape index: {}]
  %s2 = inlined_call_operand.vmem [shape: f32[2,1,32], index: 2, kind: input, shape index: {}]
  %s3 = inlined_call_operand.vmem [shape: f32[8,128], index: 3, kind: input, shape index: {}]
  %s4 = inlined_call_operand.hbm [shape: f32[192,128], index: 4, kind: input, shape index: {}]
  %s5 = inlined_call_operand.hbm [shape: f32[2,1,128], index: 5, kind: output, shape index: {}]
  %s6 = sld [smem:[#allocation0]]
  $region57: #{tpu_custom_call.1} parent=0
    _
  %s8 = ssub.s32 1, %s6
  %s9 = scalar_select 0, %s8, %s6
  $region1: #{tpu_custom_call.1} parent=0
    #allocation3 [shape = 'u8[98304]{0}', space=vmem, size = 0x18000, scoped, tag = 'input window, operand 4, single buffered']
    #allocation4 [shape = 's32[2]{0}', space=sflag, size = 0x8, scoped, tag = 'scoped memory for tpu_custom_call.1']
    #allocation5 [shape = 's32[2]{0}', space=sflag, size = 0x8, scoped, tag = 'scoped memory for tpu_custom_call.1']
    #allocation6 [shape = 'u8[1024]{0}', space=vmem, size = 0x400, scoped, tag = 'output window, operand 0']
    %10 = vsyncpa [#allocation4], 0
    %11 = vsyncpa [#allocation5], 0
    %s12 = scalar_lea.sflag [#allocation5], 1
    %13 = vsyncpa %s12, 0
    loop: start=0, step=1, limit=4
    $region2: #{tpu_custom_call.1} parent=1 // loop_pre_header
      _
    $region3: #{tpu_custom_call.1} parent=1 // loop_header
      %s15 = sphi 0, %s19
      %p16 = scmp.ge.s32.totalorder %s15, 4
      %s25 = sphi 0, %s27
      %s28 = sphi 0, %s25
      %s29 = sphi 0, %s28
      %s45 = sphi 0, %s29
      %s51 = sphi 0, %s53
      %s54 = sphi 0, %s51
      %s55 = sphi 0, %s54
      %s71 = sphi 0, %s55
      %s77 = sphi 0, %s79
      %s80 = sphi 0, %s77
      %s81 = sphi 0, %s80
      %s97 = sphi 0, %s81
      %s101 = sphi 0, %s101
      %s103 = sphi 0, %s101
      %s104 = sphi 0, %s103
      %s118 = sphi 0, %s104
      %s122 = sphi 0, %s122
      %s124 = sphi 0, %s122
      %s125 = sphi 0, %s124
      %s139 = sphi 0, %s125
      %s145 = sphi 0, %s147
      %s148 = sphi 0, %s145
      %s149 = sphi 0, %s148
      %s165 = sphi 0, %s149
    $region4: #{tpu_custom_call.1} parent=1 // loop_header_branch
      %18 = sbr.rel (%p16) target = $region8
    $region5: #{tpu_custom_call.1} parent=1 // loop_body
      %s20 = ssub.s32 %s15, 1
      %s21 = ssub.s32 %s15, 2
      %s22 = sadd.s32 %s15, 1
      %s23 = ssub.s32 %s15, %s22
      %p24 = scmp.eq.s32.totalorder %s23, 0
      %s26 = sadd.s32 %s25, 1
      %s27 = scalar_select %p24, %s25, %s26
      %p30 = pneg %p24
      %p31 = scmp.eq.s32.totalorder %s15, 1
      %p32 = por %p30, %p31
      %p33 = scmp.ne.s32.totalorder %s25, %s28
      %p34 = scmp.eq.s32.totalorder %s15, 0
      %p35 = por %p33, %p34
      %p36 = scmp.ne.s32.totalorder %s25, %s28
      %p37 = scmp.eq.s32.totalorder %s20, 1
      %p38 = por %p36, %p37
      %p39 = scmp.ne.s32.totalorder %s28, %s29
      %p40 = scmp.eq.s32.totalorder %s20, 0
      %p41 = por %p39, %p40
      %p42 = scmp.ne.s32.totalorder %s28, %s29
      %p43 = scmp.eq.s32.totalorder %s21, 1
      %p44 = por %p42, %p43
      %p46 = scmp.ne.s32.totalorder %s29, %s45
      %p47 = scmp.eq.s32.totalorder %s21, 0
      %p48 = por %p46, %p47
      %s49 = ssub.s32 %s15, %s22
      %p50 = scmp.eq.s32.totalorder %s49, 0
      %s52 = sadd.s32 %s51, 1
      %s53 = scalar_select %p50, %s51, %s52
      %p56 = pneg %p50
      %p57 = scmp.eq.s32.totalorder %s15, 1
      %p58 = por %p56, %p57
      %p59 = scmp.ne.s32.totalorder %s51, %s54
      %p60 = scmp.eq.s32.totalorder %s15, 0
      %p61 = por %p59, %p60
      %p62 = scmp.ne.s32.totalorder %s51, %s54
      %p63 = scmp.eq.s32.totalorder %s20, 1
      %p64 = por %p62, %p63
      %p65 = scmp.ne.s32.totalorder %s54, %s55
      %p66 = scmp.eq.s32.totalorder %s20, 0
      %p67 = por %p65, %p66
      %p68 = scmp.ne.s32.totalorder %s54, %s55
      %p69 = scmp.eq.s32.totalorder %s21, 1
      %p70 = por %p68, %p69
      %p72 = scmp.ne.s32.totalorder %s55, %s71
      %p73 = scmp.eq.s32.totalorder %s21, 0
      %p74 = por %p72, %p73
      %s75 = ssub.s32 %s15, %s22
      %p76 = scmp.eq.s32.totalorder %s75, 0
      %s78 = sadd.s32 %s77, 1
      %s79 = scalar_select %p76, %s77, %s78
      %p82 = pneg %p76
      %p83 = scmp.eq.s32.totalorder %s15, 1
      %p84 = por %p82, %p83
      %p85 = scmp.ne.s32.totalorder %s77, %s80
      %p86 = scmp.eq.s32.totalorder %s15, 0
      %p87 = por %p85, %p86
      %p88 = scmp.ne.s32.totalorder %s77, %s80
      %p89 = scmp.eq.s32.totalorder %s20, 1
      %p90 = por %p88, %p89
      %p91 = scmp.ne.s32.totalorder %s80, %s81
      %p92 = scmp.eq.s32.totalorder %s20, 0
      %p93 = por %p91, %p92
      %p94 = scmp.ne.s32.totalorder %s80, %s81
      %p95 = scmp.eq.s32.totalorder %s21, 1
      %p96 = por %p94, %p95
      %p98 = scmp.ne.s32.totalorder %s81, %s97
      %p99 = scmp.eq.s32.totalorder %s21, 0
      %p100 = por %p98, %p99
      %s102 = sadd.s32 %s101, 1
      %p105 = scmp.eq.s32.totalorder %s15, 1
      %p106 = scmp.ne.s32.totalorder %s101, %s103
      %p107 = scmp.eq.s32.totalorder %s15, 0
      %p108 = por %p106, %p107
      %p109 = scmp.ne.s32.totalorder %s101, %s103
      %p110 = scmp.eq.s32.totalorder %s20, 1
      %p111 = por %p109, %p110
      %p112 = scmp.ne.s32.totalorder %s103, %s104
      %p113 = scmp.eq.s32.totalorder %s20, 0
      %p114 = por %p112, %p113
      %p115 = scmp.ne.s32.totalorder %s103, %s104
      %p116 = scmp.eq.s32.totalorder %s21, 1
      %p117 = por %p115, %p116
      %p119 = scmp.ne.s32.totalorder %s104, %s118
      %p120 = scmp.eq.s32.totalorder %s21, 0
      %p121 = por %p119, %p120
      %s123 = sadd.s32 %s122, 1
      %p126 = scmp.eq.s32.totalorder %s15, 1
      %p127 = scmp.ne.s32.totalorder %s122, %s124
      %p128 = scmp.eq.s32.totalorder %s15, 0
      %p129 = por %p127, %p128
      %p130 = scmp.ne.s32.totalorder %s122, %s124
      %p131 = scmp.eq.s32.totalorder %s20, 1
      %p132 = por %p130, %p131
      %p133 = scmp.ne.s32.totalorder %s124, %s125
      %p134 = scmp.eq.s32.totalorder %s20, 0
      %p135 = por %p133, %p134
      %p136 = scmp.ne.s32.totalorder %s124, %s125
      %p137 = scmp.eq.s32.totalorder %s21, 1
      %p138 = por %p136, %p137
      %p140 = scmp.ne.s32.totalorder %s125, %s139
      %p141 = scmp.eq.s32.totalorder %s21, 0
      %p142 = por %p140, %p141
      %s143 = ssub.s32 %s15, %s22
      %p144 = scmp.eq.s32.totalorder %s143, 0
      %s146 = sadd.s32 %s145, 1
      %s147 = scalar_select %p144, %s145, %s146
      %p150 = pneg %p144
      %p151 = scmp.eq.s32.totalorder %s15, 1
      %p152 = por %p150, %p151
      %p153 = scmp.ne.s32.totalorder %s145, %s148
      %p154 = scmp.eq.s32.totalorder %s15, 0
      %p155 = por %p153, %p154
      %p156 = scmp.ne.s32.totalorder %s145, %s148
      %p157 = scmp.eq.s32.totalorder %s20, 1
      %p158 = por %p156, %p157
      %p159 = scmp.ne.s32.totalorder %s148, %s149
      %p160 = scmp.eq.s32.totalorder %s20, 0
      %p161 = por %p159, %p160
      %p162 = scmp.ne.s32.totalorder %s148, %s149
      %p163 = scmp.eq.s32.totalorder %s21, 1
      %p164 = por %p162, %p163
      %p166 = scmp.ne.s32.totalorder %s149, %s165
      %p167 = scmp.eq.s32.totalorder %s21, 0
      %p168 = por %p166, %p167
      %p169 = scmp.le.s32.totalorder 1, %s15
      %p170 = scmp.lt.s32.totalorder %s15, 3
      %p171 = pnand %p169, %p170
      %p172 = pneg %p171
      // Predicated region
      $region9: #{tpu_custom_call.1} parent=5 // pred_check
        _
      $region10: #{tpu_custom_call.1} parent=5 // pred_check_branch
        %174 = sbr.rel (%p171) target = $region12
      $region11: #{tpu_custom_call.1} parent=5 // pred_region
        %s175 = ssub.s32 %s15, 1
        // Predicated region
        $region13: #{tpu_custom_call.1} parent=11 // pred_check
          %p176 = pneg %p114
        $region14: #{tpu_custom_call.1} parent=11 // pred_check_branch
          %178 = sbr.rel (%p176) target = $region16
        $region15: #{tpu_custom_call.1} parent=11 // pred_region
          _
        $region16: #{tpu_custom_call.1} parent=11 // pred_fallthru
          _
        // Predicated region
        $region17: #{tpu_custom_call.1} parent=11 // pred_check
          %p179 = pneg %p135
        $region18: #{tpu_custom_call.1} parent=11 // pred_check_branch
          %181 = sbr.rel (%p179) target = $region20
        $region19: #{tpu_custom_call.1} parent=11 // pred_region
          %s183 = ssub.s32 3072, 3072
          %184 = vsyncadd [#allocation4], %s183
          %s185 = sshll.u32 [#allocation3], 4
          %s186 = int_to_ptr.vmem [resolvable:$true] %s185
          %191 = dma.hbm_to_vmem [thread:$0]  %s4, 3072, %s186, [#allocation4], 128, 128, 8
        $region20: #{tpu_custom_call.1} parent=11 // pred_fallthru
          _
      $region12: #{tpu_custom_call.1} parent=5 // pred_fallthru
        _
      %p192 = scmp.lt.s32.totalorder %s15, 2
      // Predicated region
      $region21: #{tpu_custom_call.1} parent=5 // pred_check
        %p193 = pneg %p192
      $region22: #{tpu_custom_call.1} parent=5 // pred_check_branch
        %195 = sbr.rel (%p193) target = $region24
      $region23: #{tpu_custom_call.1} parent=5 // pred_region
        // Predicated region
        $region25: #{tpu_custom_call.1} parent=23 // pred_check
          %p196 = pneg %p35
        $region26: #{tpu_custom_call.1} parent=23 // pred_check_branch
          %198 = sbr.rel (%p196) target = $region28
        $region27: #{tpu_custom_call.1} parent=23 // pred_region
          %p199 = scmp.lt.s32.totalorder %s15, 1
          %s200 = scalar_select %p199, %s15, 1
          %s201 = smul.addr %s200, 4
          %s202 = smul.addr %s201, 4
          %s203 = scalar_lea.vmem %s0, %s202
        $region28: #{tpu_custom_call.1} parent=23 // pred_fallthru
          _
        // Predicated region
        $region29: #{tpu_custom_call.1} parent=23 // pred_check
          %p204 = pneg %p61
        $region30: #{tpu_custom_call.1} parent=23 // pred_check_branch
          %206 = sbr.rel (%p204) target = $region32
        $region31: #{tpu_custom_call.1} parent=23 // pred_region
          %p207 = scmp.lt.s32.totalorder %s15, 1
          %s208 = scalar_select %p207, %s15, 1
          %s209 = smul.addr %s208, 4
          %s210 = smul.addr %s209, 8
          %s211 = scalar_lea.vmem %s1, %s210
        $region32: #{tpu_custom_call.1} parent=23 // pred_fallthru
          _
        // Predicated region
        $region33: #{tpu_custom_call.1} parent=23 // pred_check
          %p212 = pneg %p87
        $region34: #{tpu_custom_call.1} parent=23 // pred_check_branch
          %214 = sbr.rel (%p212) target = $region36
        $region35: #{tpu_custom_call.1} parent=23 // pred_region
          %p215 = scmp.lt.s32.totalorder %s15, 1
          %s216 = scalar_select %p215, %s15, 1
          %s217 = scalar_lea.vmem %s2, %s216
        $region36: #{tpu_custom_call.1} parent=23 // pred_fallthru
          _
      $region24: #{tpu_custom_call.1} parent=5 // pred_fallthru
        _
      %p218 = scmp.le.s32.totalorder 1, %s15
      %p219 = scmp.lt.s32.totalorder %s15, 3
      %p220 = pnand %p218, %p219
      %p221 = pneg %p220
      // Predicated region
      $region37: #{tpu_custom_call.1} parent=5 // pred_check
        _
      $region38: #{tpu_custom_call.1} parent=5 // pred_check_branch
        %223 = sbr.rel (%p220) target = $region40
      $region39: #{tpu_custom_call.1} parent=5 // pred_region
        %s224 = ssub.s32 %s15, 1
        // Predicated region
        $region41: #{tpu_custom_call.1} parent=39 // pred_check
          %p225 = pneg %p135
        $region42: #{tpu_custom_call.1} parent=39 // pred_check_branch
          %227 = sbr.rel (%p225) target = $region44
        $region43: #{tpu_custom_call.1} parent=39 // pred_region
          %228 = dma.done [#allocation4], 3072
        $region44: #{tpu_custom_call.1} parent=39 // pred_fallthru
          _
        %p229 = scmp.lt.s32.totalorder %s20, 1
        %s230 = scalar_select %p229, %s20, 1
        %s231 = smul.addr %s230, 4
        %s232 = smul.addr %s231, 4
        %s233 = scalar_lea.vmem %s0, %s232
        %p234 = pneg %p41
        %p235 = pneg %p38
        %p236 = scmp.lt.s32.totalorder %s20, 1
        %s237 = scalar_select %p236, %s20, 1
        %s238 = smul.addr %s237, 4
        %s239 = smul.addr %s238, 8
        %s240 = scalar_lea.vmem %s1, %s239
        %p241 = pneg %p67
        %p242 = pneg %p64
        %p243 = scmp.lt.s32.totalorder %s20, 1
        %s244 = scalar_select %p243, %s20, 1
        %s245 = scalar_lea.vmem %s2, %s244
        %p246 = pneg %p93
        %p247 = pneg %p90
        %p248 = pneg %p114
        %p249 = pneg %p111
        %p250 = pneg %p135
        %p251 = pneg %p132
        %p252 = pneg %p161
        %p253 = pneg %p158
        %s254 = sand.u32 %s148, 1
        %s255 = scalar_lea.sflag [#allocation5], %s254
        %s256 = sand.u32 %s148, 1
        %s257 = scalar_lea.vmem [#allocation6], %s256
        %p258 = scmp.lt.s32.totalorder %s20, 1
        %s259 = scalar_select %p258, %s20, 1
        %s260 = smul.addr %s259, 4
        %s261 = smul.addr %s260, 4
        %s262 = scalar_lea.vmem %s0, %s261
        %p263 = scmp.lt.s32.totalorder %s20, 1
        %s264 = scalar_select %p263, %s20, 1
        %s265 = smul.addr %s264, 4
        %s266 = smul.addr %s265, 8
        %s267 = scalar_lea.vmem %s1, %s266
        %p268 = scmp.lt.s32.totalorder %s20, 1
        %s269 = scalar_select %p268, %s20, 1
        %s270 = scalar_lea.vmem %s2, %s269
        %v272 = vld [vmem:[%s262] sm:$0xf]
        %v273 = vld [vmem:[%s262 + $0x4] sm:$0xf]
        %v274 = vld [vmem:[%s262 + $0x8] sm:$0xf]
        %v275 = vld [vmem:[%s262 + $0xc] sm:$0xf]
        %v276 = vld [vmem:[%s267] sm:$0xff]
        %v277 = vld [vmem:[%s267 + $0x8] sm:$0xff]
        %v278 = vld [vmem:[%s267 + $0x10] sm:$0xff]
        %v279 = vld [vmem:[%s267 + $0x18] sm:$0xff]
        %v280 = vld [vmem:[%s3] sm:$0xff]
        %v281 = vpack.c.bf16 %v277, %v276
        %v282 = vpack.c.bf16 %v279, %v278
        %v287 = vunpack.c.l.b16 %v272
        %v288 = vunpack.c.l.b16 %v273
        %v289 = vunpack.c.l.b16 %v274
        %v290 = vunpack.c.l.b16 %v275
        %v291 = vpack.c.b16 %v288, %v287
        %v292 = vpack.c.b16 %v290, %v289
        %vm293 = vcmask 261120
        %v295 = vsel %vm293, %v291, 0
        %v298 = vsel %vm293, %v292, 0
        %300 = vmatprep.subr.bf16.mxu0 0
        %301 = vmatpush1.bf16.msra.mxu0 %v281
        %302 = vmatprep.subr.bf16.mxu0 0
        %303 = vmatpush1.bf16.msra.mxu0 %v282
        %304 = vmatprep.subr.bf16.mxu0 0
        %305 = vmatpush1.bf16.msra.mxu0 0
        %306 = vmatprep.subr.bf16.mxu0 0
        %307 = vmatpush1.bf16.msra.mxu0 0
        %308 = vmatprep.subr.bf16.mxu0 0
        %309 = vmatpush1.bf16.msra.mxu0 0
        %310 = vmatprep.subr.bf16.mxu0 0
        %311 = vmatpush1.bf16.msra.mxu0 0
        %312 = vmatprep.subr.bf16.mxu0 0
        %313 = vmatpush1.bf16.msra.mxu0 0
        %314 = vmatprep.subr.bf16.mxu0 0
        %315 = vmatpush1.bf16.msra.mxu0 0
        %316 = vmatprep.subr.bf16.mxu0 0
        %317 = vmatpush1.bf16.msra.mxu0 0
        %318 = vmatprep.subr.bf16.mxu0 0
        %319 = vmatpush1.bf16.msra.mxu0 0
        %320 = vmatprep.subr.bf16.mxu0 0
        %321 = vmatpush1.bf16.msra.mxu0 0
        %322 = vmatprep.subr.bf16.mxu0 0
        %323 = vmatpush1.bf16.msra.mxu0 0
        %324 = vmatprep.subr.bf16.mxu0 0
        %325 = vmatpush1.bf16.msra.mxu0 0
        %326 = vmatprep.subr.bf16.mxu0 0
        %327 = vmatpush1.bf16.msra.mxu0 0
        %328 = vmatprep.subr.bf16.mxu0 0
        %329 = vmatpush1.bf16.msra.mxu0 0
        %330 = vmatprep.subr.bf16.mxu0 0
        %331 = vmatpush1.bf16.msra.mxu0 0
        %332 = vmatprep.mubr.bf16.mxu0 0
        %333 = vmatmul.mubr.bf16.gmra.mrb[0].mxu0 %v295
        %v334 = vpop.f32.mrb[0].mxu0
        %v335 = vadd.f32 0.0, %v334
        %v336 = vpop.f32.mrb[0].mxu0
        %v337 = vpop.f32.mrb[0].mxu0
        %v338 = vadd.f32 0.0, %v337
        %v339 = vpop.f32.mrb[0].mxu0
        %340 = vmatprep.mubr.bf16.mxu0 0
        %341 = vmatmul.mubr.bf16.gmra.mrb[0].mxu0 %v298
        %v342 = vpop.f32.mrb[0].mxu0
        %v343 = vadd.f32 0.0, %v342
        %v344 = vpop.f32.mrb[0].mxu0
        %v345 = vpop.f32.mrb[0].mxu0
        %v346 = vadd.f32 0.0, %v345
        %v347 = vpop.f32.mrb[0].mxu0
        %348 = vdwg.mxu0
        %350 = vset.pattern.permute.xlu0 0
        %351 = vperm.xlu0 %350, %v335
        %v352 = vpop.permute.xlu0 %351
        %355 = vset.pattern.permute.xlu0 0
        %356 = vperm.xlu0 %355, %v338
        %v357 = vpop.permute.xlu0 %356
        %360 = vset.pattern.permute.xlu0 0
        %361 = vperm.xlu0 %360, %v343
        %v362 = vpop.permute.xlu0 %361
        %365 = vset.pattern.permute.xlu0 0
        %366 = vperm.xlu0 %365, %v346
        %v367 = vpop.permute.xlu0 %366
        %v369 = vlaneseq
        %v370 = vshrl.u32 %v369, 7
        %v371 = vsub.s32 0, %v370
        %v372 = vrot.slane %v280, %v371
        %v373 = vmul.f32 %v352, %v372
        %v374 = vmul.f32 %v357, %v372
        %v375 = vmul.f32 %v362, %v372
        %v376 = vmul.f32 %v367, %v372
        %378 = vset.pattern.permute.xlu0 0
        %379 = vperm.xlu0 %378, %v276
        %v380 = vpop.permute.xlu0 %379
        %383 = vset.pattern.permute.xlu0 0
        %384 = vperm.xlu0 %383, %v277
        %v385 = vpop.permute.xlu0 %384
        %388 = vset.pattern.permute.xlu0 0
        %389 = vperm.xlu0 %388, %v278
        %v390 = vpop.permute.xlu0 %389
        %393 = vset.pattern.permute.xlu0 0
        %394 = vperm.xlu0 %393, %v279
        %v395 = vpop.permute.xlu0 %394
        %v397 = vlaneseq
        %v398 = vshrl.u32 %v397, 7
        %v399 = vsub.s32 1, %v398
        %v400 = vrot.slane %v280, %v399
        %v401 = vmul.f32 %v380, %v400
        %v402 = vmul.f32 %v385, %v400
        %v403 = vmul.f32 %v390, %v400
        %v404 = vmul.f32 %v395, %v400
        %v405 = vadd.f32 %v373, %v401
        %v406 = vadd.f32 %v374, %v402
        %v407 = vadd.f32 %v375, %v403
        %v408 = vadd.f32 %v376, %v404
        %v409 = vlaneseq
        %v410 = vshrl.u32 %v409, 7
        %v411 = vsub.s32 2, %v410
        %v412 = vrot.slane %v280, %v411
        %v413 = vadd.f32 %v405, %v412
        %v414 = vadd.f32 %v406, %v412
        %v415 = vadd.f32 %v407, %v412
        %v416 = vadd.f32 %v408, %v412
        %v417 = vmax.f32 %v413, 0.0
        %v418 = vmax.f32 %v414, 0.0
        %v419 = vmax.f32 %v415, 0.0
        %v420 = vmax.f32 %v416, 0.0
        %v421 = vpack.c.bf16 %v418, %v417
        %v422 = vpack.c.bf16 %v420, %v419
        %423 = vmatprep.subr.bf16.mxu0 0
        %424 = vmatpush1.bf16.msra.mxu0 %v421
        %425 = vmatprep.subr.bf16.mxu0 0
        %426 = vmatpush1.bf16.msra.mxu0 %v422
        %427 = vmatprep.subr.bf16.mxu0 0
        %428 = vmatpush1.bf16.msra.mxu0 0
        %429 = vmatprep.subr.bf16.mxu0 0
        %430 = vmatpush1.bf16.msra.mxu0 0
        %431 = vmatprep.subr.bf16.mxu0 0
        %432 = vmatpush1.bf16.msra.mxu0 0
        %433 = vmatprep.subr.bf16.mxu0 0
        %434 = vmatpush1.bf16.msra.mxu0 0
        %435 = vmatprep.subr.bf16.mxu0 0
        %436 = vmatpush1.bf16.msra.mxu0 0
        %437 = vmatprep.subr.bf16.mxu0 0
        %438 = vmatpush1.bf16.msra.mxu0 0
        %439 = vmatprep.subr.bf16.mxu0 0
        %440 = vmatpush1.bf16.msra.mxu0 0
        %441 = vmatprep.subr.bf16.mxu0 0
        %442 = vmatpush1.bf16.msra.mxu0 0
        %443 = vmatprep.subr.bf16.mxu0 0
        %444 = vmatpush1.bf16.msra.mxu0 0
        %445 = vmatprep.subr.bf16.mxu0 0
        %446 = vmatpush1.bf16.msra.mxu0 0
        %447 = vmatprep.subr.bf16.mxu0 0
        %448 = vmatpush1.bf16.msra.mxu0 0
        %449 = vmatprep.subr.bf16.mxu0 0
        %450 = vmatpush1.bf16.msra.mxu0 0
        %451 = vmatprep.subr.bf16.mxu0 0
        %452 = vmatpush1.bf16.msra.mxu0 0
        %453 = vmatprep.subr.bf16.mxu0 0
        %454 = vmatpush1.bf16.msra.mxu0 0
        %455 = vmatprep.mubr.bf16.mxu0 0
        %456 = vmatmul.mubr.bf16.gmra.mrb[0].mxu0 %v295
        %v457 = vpop.f32.mrb[0].mxu0
        %v458 = vadd.f32 0.0, %v457
        %v459 = vpop.f32.mrb[0].mxu0
        %v460 = vpop.f32.mrb[0].mxu0
        %v461 = vadd.f32 0.0, %v460
        %v462 = vpop.f32.mrb[0].mxu0
        %463 = vmatprep.mubr.bf16.mxu0 0
        %464 = vmatmul.mubr.bf16.gmra.mrb[0].mxu0 %v298
        %v465 = vpop.f32.mrb[0].mxu0
        %v466 = vadd.f32 0.0, %v465
        %v467 = vpop.f32.mrb[0].mxu0
        %v468 = vpop.f32.mrb[0].mxu0
        %v469 = vadd.f32 0.0, %v468
        %v470 = vpop.f32.mrb[0].mxu0
        %471 = vdwg.mxu0
        %vm472 = vcmask 523264
        %473 = vst.msk [vmem:[#allocation2] sm:$0xff] %vm472, %v458
        %474 = vst.msk [vmem:[#allocation2 + $0x8] sm:$0xff] %vm472, %v461
        %475 = vst.msk [vmem:[#allocation2 + $0x10] sm:$0xff] %vm472, %v466
        %476 = vst.msk [vmem:[#allocation2 + $0x18] sm:$0xff] %vm472, %v469
        %481 = vrot.lane.b32.xlu0 %v417, 64
        %v482 = vpop.permute.xlu0 %481
        %483 = vrot.lane.b32.xlu0 %v418, 64
        %v484 = vpop.permute.xlu0 %483
        %485 = vrot.lane.b32.xlu0 %v419, 64
        %v486 = vpop.permute.xlu0 %485
        %487 = vrot.lane.b32.xlu0 %v420, 64
        %v488 = vpop.permute.xlu0 %487
        %vm493 = vcmask 1048064
        %494 = vst.msk [vmem:[#allocation2] sm:$0xff] %vm493, %v482
        %495 = vst.msk [vmem:[#allocation2 + $0x8] sm:$0xff] %vm493, %v484
        %496 = vst.msk [vmem:[#allocation2 + $0x10] sm:$0xff] %vm493, %v486
        %497 = vst.msk [vmem:[#allocation2 + $0x18] sm:$0xff] %vm493, %v488
        %v498 = vld [vmem:[#allocation3] sm:$0xff]
        %v499 = vld [vmem:[#allocation3 + $0x8] sm:$0xff]
        %v500 = vld [vmem:[#allocation3 + $0x10] sm:$0xff]
        %v501 = vld [vmem:[#allocation3 + $0x18] sm:$0xff]
        %v502 = vld [vmem:[#allocation3 + $0x20] sm:$0xff]
        %v503 = vld [vmem:[#allocation3 + $0x28] sm:$0xff]
        %v504 = vld [vmem:[#allocation3 + $0x30] sm:$0xff]
        %v505 = vld [vmem:[#allocation3 + $0x38] sm:$0xff]
        %v506 = vld [vmem:[#allocation3 + $0x40] sm:$0xff]
        %v507 = vld [vmem:[#allocation3 + $0x48] sm:$0xff]
        %v508 = vld [vmem:[#allocation3 + $0x50] sm:$0xff]
        %v509 = vld [vmem:[#allocation3 + $0x58] sm:$0xff]
        %v510 = vld [vmem:[#allocation3 + $0x60] sm:$0xff]
        %v511 = vld [vmem:[#allocation3 + $0x68] sm:$0xff]
        %v512 = vld [vmem:[#allocation3 + $0x70] sm:$0xff]
        %v513 = vld [vmem:[#allocation3 + $0x78] sm:$0xff]
        %v514 = vld [vmem:[#allocation2] sm:$0xff]
        %v515 = vld [vmem:[#allocation2 + $0x8] sm:$0xff]
        %v516 = vld [vmem:[#allocation2 + $0x10] sm:$0xff]
        %v517 = vld [vmem:[#allocation2 + $0x18] sm:$0xff]
        %v518 = vlaneseq
        %v519 = vshrl.u32 %v518, 7
        %v520 = vsub.s32 3, %v519
        %v521 = vrot.slane %v280, %v520
        %522 = vmatprep.subr.mxu0 0.0
        %523 = vmatpush1.msra.mxu0 %v498
        %524 = vmatprep.subr.mxu0 0.0
        %525 = vmatpush1.msra.mxu0 %v499
        %526 = vmatprep.subr.mxu0 0.0
        %527 = vmatpush1.msra.mxu0 %v500
        %528 = vmatprep.subr.mxu0 0.0
        %529 = vmatpush1.msra.mxu0 %v501
        %530 = vmatprep.subr.mxu0 0.0
        %531 = vmatpush1.msra.mxu0 %v502
        %532 = vmatprep.subr.mxu0 0.0
        %533 = vmatpush1.msra.mxu0 %v503
        %534 = vmatprep.subr.mxu0 0.0
        %535 = vmatpush1.msra.mxu0 %v504
        %536 = vmatprep.subr.mxu0 0.0
        %537 = vmatpush1.msra.mxu0 %v505
        %538 = vmatprep.subr.mxu0 0.0
        %539 = vmatpush1.msra.mxu0 %v506
        %540 = vmatprep.subr.mxu0 0.0
        %541 = vmatpush1.msra.mxu0 %v507
        %542 = vmatprep.subr.mxu0 0.0
        %543 = vmatpush1.msra.mxu0 %v508
        %544 = vmatprep.subr.mxu0 0.0
        %545 = vmatpush1.msra.mxu0 %v509
        %546 = vmatprep.subr.mxu0 0.0
        %547 = vmatpush1.msra.mxu0 %v510
        %548 = vmatprep.subr.mxu0 0.0
        %549 = vmatpush1.msra.mxu0 %v511
        %550 = vmatprep.subr.mxu0 0.0
        %551 = vmatpush1.msra.mxu0 %v512
        %552 = vmatprep.subr.mxu0 0.0
        %553 = vmatpush1.msra.mxu0 %v513
        %554 = vmatprep.subr.mxu0 0.0
        %555 = vmatpush1.msra.mxu0 0.0
        %556 = vmatprep.subr.mxu0 0.0
        %557 = vmatpush1.msra.mxu0 0.0
        %558 = vmatprep.subr.mxu0 0.0
        %559 = vmatpush1.msra.mxu0 0.0
        %560 = vmatprep.subr.mxu0 0.0
        %561 = vmatpush1.msra.mxu0 0.0
        %562 = vmatprep.subr.mxu0 0.0
        %563 = vmatpush1.msra.mxu0 0.0
        %564 = vmatprep.subr.mxu0 0.0
        %565 = vmatpush1.msra.mxu0 0.0
        %566 = vmatprep.subr.mxu0 0.0
        %567 = vmatpush1.msra.mxu0 0.0
        %568 = vmatprep.subr.mxu0 0.0
        %569 = vmatpush1.msra.mxu0 0.0
        %570 = vmatprep.subr.mxu0 0.0
        %571 = vmatpush1.msra.mxu0 0.0
        %572 = vmatprep.subr.mxu0 0.0
        %573 = vmatpush1.msra.mxu0 0.0
        %574 = vmatprep.subr.mxu0 0.0
        %575 = vmatpush1.msra.mxu0 0.0
        %576 = vmatprep.subr.mxu0 0.0
        %577 = vmatpush1.msra.mxu0 0.0
        %578 = vmatprep.subr.mxu0 0.0
        %579 = vmatpush1.msra.mxu0 0.0
        %580 = vmatprep.subr.mxu0 0.0
        %581 = vmatpush1.msra.mxu0 0.0
        %582 = vmatprep.subr.mxu0 0.0
        %583 = vmatpush1.msra.mxu0 0.0
        %584 = vmatprep.subr.mxu0 0.0
        %585 = vmatpush1.msra.mxu0 0.0
        %586 = vmatprep.mubr.f32.mxu0 0.0
        %587 = vmatmul.mubr.f32.gmra.mrb[0].mxu0 %v514
        %v588 = vpop.f32.mrb[0].mxu0
        %v589 = vadd.f32 %v521, %v588
        %v590 = vpop.f32.mrb[0].mxu0
        %591 = vmatprep.mubr.f32.mxu0 0.0
        %592 = vmatmul.mubr.f32.gmra.mrb[0].mxu0 %v515
        %v593 = vpop.f32.mrb[0].mxu0
        %v594 = vadd.f32 %v521, %v593
        %v595 = vpop.f32.mrb[0].mxu0
        %596 = vmatprep.mubr.f32.mxu0 0.0
        %597 = vmatmul.mubr.f32.gmra.mrb[0].mxu0 %v516
        %v598 = vpop.f32.mrb[0].mxu0
        %v599 = vadd.f32 %v521, %v598
        %v600 = vpop.f32.mrb[0].mxu0
        %601 = vmatprep.mubr.f32.mxu0 0.0
        %602 = vmatmul.mubr.f32.gmra.mrb[0].mxu0 %v517
        %v603 = vpop.f32.mrb[0].mxu0
        %v604 = vadd.f32 %v521, %v603
        %v605 = vpop.f32.mrb[0].mxu0
        %606 = vdwg.mxu0
        %v607 = vmax.f32 %v589, 0.0
        %v608 = vmax.f32 %v594, 0.0
        %v609 = vmax.f32 %v599, 0.0
        %v610 = vmax.f32 %v604, 0.0
        %v611 = vld [vmem:[#allocation3 + $0x80] sm:$0xff]
        %v612 = vld [vmem:[#allocation3 + $0x88] sm:$0xff]
        %v613 = vld [vmem:[#allocation3 + $0x90] sm:$0xff]
        %v614 = vld [vmem:[#allocation3 + $0x98] sm:$0xff]
        %v615 = vld [vmem:[#allocation3 + $0xa0] sm:$0xff]
        %v616 = vld [vmem:[#allocation3 + $0xa8] sm:$0xff]
        %v617 = vld [vmem:[#allocation3 + $0xb0] sm:$0xff]
        %v618 = vlaneseq
        %v619 = vshrl.u32 %v618, 7
        %v620 = vsub.s32 4, %v619
        %v621 = vrot.slane %v280, %v620
        %v623 = vsel %vm293, %v607, 0
        %v626 = vsel %vm293, %v608, 0
        %v629 = vsel %vm293, %v609, 0
        %v632 = vsel %vm293, %v610, 0
        %634 = vmatprep.subr.mxu0 0.0
        %635 = vmatpush1.msra.mxu0 %v611
        %636 = vmatprep.subr.mxu0 0.0
        %637 = vmatpush1.msra.mxu0 %v612
        %638 = vmatprep.subr.mxu0 0.0
        %639 = vmatpush1.msra.mxu0 %v613
        %640 = vmatprep.subr.mxu0 0.0
        %641 = vmatpush1.msra.mxu0 %v614
        %642 = vmatprep.subr.mxu0 0.0
        %643 = vmatpush1.msra.mxu0 0.0
        %644 = vmatprep.subr.mxu0 0.0
        %645 = vmatpush1.msra.mxu0 0.0
        %646 = vmatprep.subr.mxu0 0.0
        %647 = vmatpush1.msra.mxu0 0.0
        %648 = vmatprep.subr.mxu0 0.0
        %649 = vmatpush1.msra.mxu0 0.0
        %650 = vmatprep.subr.mxu0 0.0
        %651 = vmatpush1.msra.mxu0 0.0
        %652 = vmatprep.subr.mxu0 0.0
        %653 = vmatpush1.msra.mxu0 0.0
        %654 = vmatprep.subr.mxu0 0.0
        %655 = vmatpush1.msra.mxu0 0.0
        %656 = vmatprep.subr.mxu0 0.0
        %657 = vmatpush1.msra.mxu0 0.0
        %658 = vmatprep.subr.mxu0 0.0
        %659 = vmatpush1.msra.mxu0 0.0
        %660 = vmatprep.subr.mxu0 0.0
        %661 = vmatpush1.msra.mxu0 0.0
        %662 = vmatprep.subr.mxu0 0.0
        %663 = vmatpush1.msra.mxu0 0.0
        %664 = vmatprep.subr.mxu0 0.0
        %665 = vmatpush1.msra.mxu0 0.0
        %666 = vmatprep.subr.mxu0 0.0
        %667 = vmatpush1.msra.mxu0 0.0
        %668 = vmatprep.subr.mxu0 0.0
        %669 = vmatpush1.msra.mxu0 0.0
        %670 = vmatprep.subr.mxu0 0.0
        %671 = vmatpush1.msra.mxu0 0.0
        %672 = vmatprep.subr.mxu0 0.0
        %673 = vmatpush1.msra.mxu0 0.0
        %674 = vmatprep.subr.mxu0 0.0
        %675 = vmatpush1.msra.mxu0 0.0
        %676 = vmatprep.subr.mxu0 0.0
        %677 = vmatpush1.msra.mxu0 0.0
        %678 = vmatprep.subr.mxu0 0.0
        %679 = vmatpush1.msra.mxu0 0.0
        %680 = vmatprep.subr.mxu0 0.0
        %681 = vmatpush1.msra.mxu0 0.0
        %682 = vmatprep.subr.mxu0 0.0
        %683 = vmatpush1.msra.mxu0 0.0
        %684 = vmatprep.subr.mxu0 0.0
        %685 = vmatpush1.msra.mxu0 0.0
        %686 = vmatprep.subr.mxu0 0.0
        %687 = vmatpush1.msra.mxu0 0.0
        %688 = vmatprep.subr.mxu0 0.0
        %689 = vmatpush1.msra.mxu0 0.0
        %690 = vmatprep.subr.mxu0 0.0
        %691 = vmatpush1.msra.mxu0 0.0
        %692 = vmatprep.subr.mxu0 0.0
        %693 = vmatpush1.msra.mxu0 0.0
        %694 = vmatprep.subr.mxu0 0.0
        %695 = vmatpush1.msra.mxu0 0.0
        %696 = vmatprep.subr.mxu0 0.0
        %697 = vmatpush1.msra.mxu0 0.0
        %698 = vmatprep.mubr.f32.mxu0 0.0
        %699 = vmatmul.mubr.f32.gmra.mrb[0].mxu0 %v623
        %v700 = vpop.f32.mrb[0].mxu0
        %v701 = vadd.f32 %v621, %v700
        %v702 = vpop.f32.mrb[0].mxu0
        %703 = vmatprep.mubr.f32.mxu0 0.0
        %704 = vmatmul.mubr.f32.gmra.mrb[0].mxu0 %v626
        %v705 = vpop.f32.mrb[0].mxu0
        %v706 = vadd.f32 %v621, %v705
        %v707 = vpop.f32.mrb[0].mxu0
        %708 = vmatprep.mubr.f32.mxu0 0.0
        %709 = vmatmul.mubr.f32.gmra.mrb[0].mxu0 %v629
        %v710 = vpop.f32.mrb[0].mxu0
        %v711 = vadd.f32 %v621, %v710
        %v712 = vpop.f32.mrb[0].mxu0
        %713 = vmatprep.mubr.f32.mxu0 0.0
        %714 = vmatmul.mubr.f32.gmra.mrb[0].mxu0 %v632
        %v715 = vpop.f32.mrb[0].mxu0
        %v716 = vadd.f32 %v621, %v715
        %v717 = vpop.f32.mrb[0].mxu0
        %718 = vdwg.mxu0
        %v719 = vmax.f32 %v701, 0.0
        %v720 = vmax.f32 %v706, 0.0
        %v721 = vmax.f32 %v711, 0.0
        %v722 = vmax.f32 %v716, 0.0
        %v723 = vlaneseq
        %v724 = vshrl.u32 %v723, 7
        %v725 = vsub.s32 5, %v724
        %v726 = vrot.slane %v280, %v725
        %vm727 = vcmask 130048
        %v729 = vsel %vm727, %v719, 0
        %v732 = vsel %vm727, %v720, 0
        %v735 = vsel %vm727, %v721, 0
        %v738 = vsel %vm727, %v722, 0
        %740 = vmatprep.subr.mxu0 0.0
        %741 = vmatpush1.msra.mxu0 %v615
        %742 = vmatprep.subr.mxu0 0.0
        %743 = vmatpush1.msra.mxu0 %v616
        %744 = vmatprep.subr.mxu0 0.0
        %745 = vmatpush1.msra.mxu0 0.0
        %746 = vmatprep.subr.mxu0 0.0
        %747 = vmatpush1.msra.mxu0 0.0
        %748 = vmatprep.subr.mxu0 0.0
        %749 = vmatpush1.msra.mxu0 0.0
        %750 = vmatprep.subr.mxu0 0.0
        %751 = vmatpush1.msra.mxu0 0.0
        %752 = vmatprep.subr.mxu0 0.0
        %753 = vmatpush1.msra.mxu0 0.0
        %754 = vmatprep.subr.mxu0 0.0
        %755 = vmatpush1.msra.mxu0 0.0
        %756 = vmatprep.subr.mxu0 0.0
        %757 = vmatpush1.msra.mxu0 0.0
        %758 = vmatprep.subr.mxu0 0.0
        %759 = vmatpush1.msra.mxu0 0.0
        %760 = vmatprep.subr.mxu0 0.0
        %761 = vmatpush1.msra.mxu0 0.0
        %762 = vmatprep.subr.mxu0 0.0
        %763 = vmatpush1.msra.mxu0 0.0
        %764 = vmatprep.subr.mxu0 0.0
        %765 = vmatpush1.msra.mxu0 0.0
        %766 = vmatprep.subr.mxu0 0.0
        %767 = vmatpush1.msra.mxu0 0.0
        %768 = vmatprep.subr.mxu0 0.0
        %769 = vmatpush1.msra.mxu0 0.0
        %770 = vmatprep.subr.mxu0 0.0
        %771 = vmatpush1.msra.mxu0 0.0
        %772 = vmatprep.subr.mxu0 0.0
        %773 = vmatpush1.msra.mxu0 0.0
        %774 = vmatprep.subr.mxu0 0.0
        %775 = vmatpush1.msra.mxu0 0.0
        %776 = vmatprep.subr.mxu0 0.0
        %777 = vmatpush1.msra.mxu0 0.0
        %778 = vmatprep.subr.mxu0 0.0
        %779 = vmatpush1.msra.mxu0 0.0
        %780 = vmatprep.subr.mxu0 0.0
        %781 = vmatpush1.msra.mxu0 0.0
        %782 = vmatprep.subr.mxu0 0.0
        %783 = vmatpush1.msra.mxu0 0.0
        %784 = vmatprep.subr.mxu0 0.0
        %785 = vmatpush1.msra.mxu0 0.0
        %786 = vmatprep.subr.mxu0 0.0
        %787 = vmatpush1.msra.mxu0 0.0
        %788 = vmatprep.subr.mxu0 0.0
        %789 = vmatpush1.msra.mxu0 0.0
        %790 = vmatprep.subr.mxu0 0.0
        %791 = vmatpush1.msra.mxu0 0.0
        %792 = vmatprep.subr.mxu0 0.0
        %793 = vmatpush1.msra.mxu0 0.0
        %794 = vmatprep.subr.mxu0 0.0
        %795 = vmatpush1.msra.mxu0 0.0
        %796 = vmatprep.subr.mxu0 0.0
        %797 = vmatpush1.msra.mxu0 0.0
        %798 = vmatprep.subr.mxu0 0.0
        %799 = vmatpush1.msra.mxu0 0.0
        %800 = vmatprep.subr.mxu0 0.0
        %801 = vmatpush1.msra.mxu0 0.0
        %802 = vmatprep.subr.mxu0 0.0
        %803 = vmatpush1.msra.mxu0 0.0
        %804 = vmatprep.mubr.f32.mxu0 0.0
        %805 = vmatmul.mubr.f32.gmra.mrb[0].mxu0 %v729
        %v806 = vpop.f32.mrb[0].mxu0
        %v807 = vadd.f32 %v726, %v806
        %v808 = vpop.f32.mrb[0].mxu0
        %809 = vmatprep.mubr.f32.mxu0 0.0
        %810 = vmatmul.mubr.f32.gmra.mrb[0].mxu0 %v732
        %v811 = vpop.f32.mrb[0].mxu0
        %v812 = vadd.f32 %v726, %v811
        %v813 = vpop.f32.mrb[0].mxu0
        %814 = vmatprep.mubr.f32.mxu0 0.0
        %815 = vmatmul.mubr.f32.gmra.mrb[0].mxu0 %v735
        %v816 = vpop.f32.mrb[0].mxu0
        %v817 = vadd.f32 %v726, %v816
        %v818 = vpop.f32.mrb[0].mxu0
        %819 = vmatprep.mubr.f32.mxu0 0.0
        %820 = vmatmul.mubr.f32.gmra.mrb[0].mxu0 %v738
        %v821 = vpop.f32.mrb[0].mxu0
        %v822 = vadd.f32 %v726, %v821
        %v823 = vpop.f32.mrb[0].mxu0
        %824 = vdwg.mxu0
        %v825 = vmax.f32 %v807, 0.0
        %v826 = vmax.f32 %v812, 0.0
        %v827 = vmax.f32 %v817, 0.0
        %v828 = vmax.f32 %v822, 0.0
        %v829 = vlaneseq
        %v830 = vshrl.u32 %v829, 7
        %v831 = vsub.s32 6, %v830
        %v832 = vrot.slane %v280, %v831
        %vm833 = vcmask 64512
        %v835 = vsel %vm833, %v825, 0
        %v838 = vsel %vm833, %v826, 0
        %v841 = vsel %vm833, %v827, 0
        %v844 = vsel %vm833, %v828, 0
        %846 = vmatprep.subr.mxu0 0.0
        %847 = vmatpush1.msra.mxu0 %v617
        %848 = vmatprep.subr.mxu0 0.0
        %849 = vmatpush1.msra.mxu0 0.0
        %850 = vmatprep.subr.mxu0 0.0
        %851 = vmatpush1.msra.mxu0 0.0
        %852 = vmatprep.subr.mxu0 0.0
        %853 = vmatpush1.msra.mxu0 0.0
        %854 = vmatprep.subr.mxu0 0.0
        %855 = vmatpush1.msra.mxu0 0.0
        %856 = vmatprep.subr.mxu0 0.0
        %857 = vmatpush1.msra.mxu0 0.0
        %858 = vmatprep.subr.mxu0 0.0
        %859 = vmatpush1.msra.mxu0 0.0
        %860 = vmatprep.subr.mxu0 0.0
        %861 = vmatpush1.msra.mxu0 0.0
        %862 = vmatprep.subr.mxu0 0.0
        %863 = vmatpush1.msra.mxu0 0.0
        %864 = vmatprep.subr.mxu0 0.0
        %865 = vmatpush1.msra.mxu0 0.0
        %866 = vmatprep.subr.mxu0 0.0
        %867 = vmatpush1.msra.mxu0 0.0
        %868 = vmatprep.subr.mxu0 0.0
        %869 = vmatpush1.msra.mxu0 0.0
        %870 = vmatprep.subr.mxu0 0.0
        %871 = vmatpush1.msra.mxu0 0.0
        %872 = vmatprep.subr.mxu0 0.0
        %873 = vmatpush1.msra.mxu0 0.0
        %874 = vmatprep.subr.mxu0 0.0
        %875 = vmatpush1.msra.mxu0 0.0
        %876 = vmatprep.subr.mxu0 0.0
        %877 = vmatpush1.msra.mxu0 0.0
        %878 = vmatprep.subr.mxu0 0.0
        %879 = vmatpush1.msra.mxu0 0.0
        %880 = vmatprep.subr.mxu0 0.0
        %881 = vmatpush1.msra.mxu0 0.0
        %882 = vmatprep.subr.mxu0 0.0
        %883 = vmatpush1.msra.mxu0 0.0
        %884 = vmatprep.subr.mxu0 0.0
        %885 = vmatpush1.msra.mxu0 0.0
        %886 = vmatprep.subr.mxu0 0.0
        %887 = vmatpush1.msra.mxu0 0.0
        %888 = vmatprep.subr.mxu0 0.0
        %889 = vmatpush1.msra.mxu0 0.0
        %890 = vmatprep.subr.mxu0 0.0
        %891 = vmatpush1.msra.mxu0 0.0
        %892 = vmatprep.subr.mxu0 0.0
        %893 = vmatpush1.msra.mxu0 0.0
        %894 = vmatprep.subr.mxu0 0.0
        %895 = vmatpush1.msra.mxu0 0.0
        %896 = vmatprep.subr.mxu0 0.0
        %897 = vmatpush1.msra.mxu0 0.0
        %898 = vmatprep.subr.mxu0 0.0
        %899 = vmatpush1.msra.mxu0 0.0
        %900 = vmatprep.subr.mxu0 0.0
        %901 = vmatpush1.msra.mxu0 0.0
        %902 = vmatprep.subr.mxu0 0.0
        %903 = vmatpush1.msra.mxu0 0.0
        %904 = vmatprep.subr.mxu0 0.0
        %905 = vmatpush1.msra.mxu0 0.0
        %906 = vmatprep.subr.mxu0 0.0
        %907 = vmatpush1.msra.mxu0 0.0
        %908 = vmatprep.subr.mxu0 0.0
        %909 = vmatpush1.msra.mxu0 0.0
        %910 = vmatprep.mubr.f32.mxu0 0.0
        %911 = vmatmul.mubr.f32.gmra.mrb[0].mxu0 %v835
        %v912 = vpop.f32.mrb[0].mxu0
        %v913 = vadd.f32 %v832, %v912
        %v914 = vpop.f32.mrb[0].mxu0
        %915 = vmatprep.mubr.f32.mxu0 0.0
        %916 = vmatmul.mubr.f32.gmra.mrb[0].mxu0 %v838
        %v917 = vpop.f32.mrb[0].mxu0
        %v918 = vadd.f32 %v832, %v917
        %v919 = vpop.f32.mrb[0].mxu0
        %920 = vmatprep.mubr.f32.mxu0 0.0
        %921 = vmatmul.mubr.f32.gmra.mrb[0].mxu0 %v841
        %v922 = vpop.f32.mrb[0].mxu0
        %v923 = vadd.f32 %v832, %v922
        %v924 = vpop.f32.mrb[0].mxu0
        %925 = vmatprep.mubr.f32.mxu0 0.0
        %926 = vmatmul.mubr.f32.gmra.mrb[0].mxu0 %v844
        %v927 = vpop.f32.mrb[0].mxu0
        %v928 = vadd.f32 %v832, %v927
        %v929 = vpop.f32.mrb[0].mxu0
        %930 = vdwg.mxu0
        %v931 = vld [vmem:[%s270] sm:$0x1]
        %v933 = vsel %vm293, %v931, 0
        %935 = vmatprep.subr.mxu0 0.0
        %936 = vmatpush1.msra.mxu0 %v913
        %937 = vmatprep.subr.mxu0 0.0
        %938 = vmatpush1.msra.mxu0 %v918
        %939 = vmatprep.subr.mxu0 0.0
        %940 = vmatpush1.msra.mxu0 %v923
        %941 = vmatprep.subr.mxu0 0.0
        %942 = vmatpush1.msra.mxu0 %v928
        %943 = vmatprep.subr.mxu0 0.0
        %944 = vmatpush1.msra.mxu0 0.0
        %945 = vmatprep.subr.mxu0 0.0
        %946 = vmatpush1.msra.mxu0 0.0
        %947 = vmatprep.subr.mxu0 0.0
        %948 = vmatpush1.msra.mxu0 0.0
        %949 = vmatprep.subr.mxu0 0.0
        %950 = vmatpush1.msra.mxu0 0.0
        %951 = vmatprep.subr.mxu0 0.0
        %952 = vmatpush1.msra.mxu0 0.0
        %953 = vmatprep.subr.mxu0 0.0
        %954 = vmatpush1.msra.mxu0 0.0
        %955 = vmatprep.subr.mxu0 0.0
        %956 = vmatpush1.msra.mxu0 0.0
        %957 = vmatprep.subr.mxu0 0.0
        %958 = vmatpush1.msra.mxu0 0.0
        %959 = vmatprep.subr.mxu0 0.0
        %960 = vmatpush1.msra.mxu0 0.0
        %961 = vmatprep.subr.mxu0 0.0
        %962 = vmatpush1.msra.mxu0 0.0
        %963 = vmatprep.subr.mxu0 0.0
        %964 = vmatpush1.msra.mxu0 0.0
        %965 = vmatprep.subr.mxu0 0.0
        %966 = vmatpush1.msra.mxu0 0.0
        %967 = vmatprep.subr.mxu0 0.0
        %968 = vmatpush1.msra.mxu0 0.0
        %969 = vmatprep.subr.mxu0 0.0
        %970 = vmatpush1.msra.mxu0 0.0
        %971 = vmatprep.subr.mxu0 0.0
        %972 = vmatpush1.msra.mxu0 0.0
        %973 = vmatprep.subr.mxu0 0.0
        %974 = vmatpush1.msra.mxu0 0.0
        %975 = vmatprep.subr.mxu0 0.0
        %976 = vmatpush1.msra.mxu0 0.0
        %977 = vmatprep.subr.mxu0 0.0
        %978 = vmatpush1.msra.mxu0 0.0
        %979 = vmatprep.subr.mxu0 0.0
        %980 = vmatpush1.msra.mxu0 0.0
        %981 = vmatprep.subr.mxu0 0.0
        %982 = vmatpush1.msra.mxu0 0.0
        %983 = vmatprep.subr.mxu0 0.0
        %984 = vmatpush1.msra.mxu0 0.0
        %985 = vmatprep.subr.mxu0 0.0
        %986 = vmatpush1.msra.mxu0 0.0
        %987 = vmatprep.subr.mxu0 0.0
        %988 = vmatpush1.msra.mxu0 0.0
        %989 = vmatprep.subr.mxu0 0.0
        %990 = vmatpush1.msra.mxu0 0.0
        %991 = vmatprep.subr.mxu0 0.0
        %992 = vmatpush1.msra.mxu0 0.0
        %993 = vmatprep.subr.mxu0 0.0
        %994 = vmatpush1.msra.mxu0 0.0
        %995 = vmatprep.subr.mxu0 0.0
        %996 = vmatpush1.msra.mxu0 0.0
        %997 = vmatprep.subr.mxu0 0.0
        %998 = vmatpush1.msra.mxu0 0.0
        %999 = vmatprep.mubr.f32.mxu0 0.0
        %1000 = vmatmul.mubr.f32.gmra.mrb[0].mxu0 %v933
        %v1001 = vpop.f32.mrb[0].mxu0
        %v1002 = vadd.f32 0.0, %v1001
        %v1003 = vpop.f32.mrb[0].mxu0
        %1004 = vdwg.mxu0
        %1006 = vset.pattern.permute.xlu0 0
        %1007 = vperm.xlu0 %1006, %v1002
        %v1008 = vpop.permute.xlu0 %1007
        %v1010 = vxor.u32 %v1008, 2147483648
        %v1011 = vmul.f32 %v1010, 1.442695
        %v1012 = vpow.pop %v1011
        %v1013 = vadd.f32 %v1012, 1.0
        %v1014 = vrcp.pop %v1013
        %v1015 = vmul.f32 1.0, %v1014
        %1016 = vst [vmem:[%s257] sm:$0x1] %v1015
        %s1017 = sand.u32 %s148, 1
        %s1018 = scalar_lea.sflag [#allocation5], %s1017
        %s1019 = sand.u32 %s148, 1
        %s1020 = scalar_lea.vmem [#allocation6], %s1019
        // Predicated region
        $region45: #{tpu_custom_call.1} parent=39 // pred_check
          %p1021 = pneg %p158
        $region46: #{tpu_custom_call.1} parent=39 // pred_check_branch
          %1023 = sbr.rel (%p1021) target = $region48
        $region47: #{tpu_custom_call.1} parent=39 // pred_region
          %s1025 = ssub.s32 16, 16
          %1026 = vsyncadd %s1018, %s1025
          %s1027 = smul.addr %s20, 16
          %s1028 = scalar_lea.hbm %s5, %s1027
          %s1030 = sshll.u32 %s1020, 4
          %s1031 = int_to_ptr.vmem [resolvable:$true] %s1030
          %1033 = dma.vmem_to_hbm [thread:$0]  %s1031, 16, %s1028, %s1018
        $region48: #{tpu_custom_call.1} parent=39 // pred_fallthru
          _
      $region40: #{tpu_custom_call.1} parent=5 // pred_fallthru
        _
      %p1034 = scmp.le.s32.totalorder 2, %s15
      // Predicated region
      $region49: #{tpu_custom_call.1} parent=5 // pred_check
        %p1035 = pneg %p1034
      $region50: #{tpu_custom_call.1} parent=5 // pred_check_branch
        %1037 = sbr.rel (%p1035) target = $region52
      $region51: #{tpu_custom_call.1} parent=5 // pred_region
        %s1038 = ssub.s32 %s15, 2
        // Predicated region
        $region53: #{tpu_custom_call.1} parent=51 // pred_check
          %p1039 = pneg %p164
        $region54: #{tpu_custom_call.1} parent=51 // pred_check_branch
          %1041 = sbr.rel (%p1039) target = $region56
        $region55: #{tpu_custom_call.1} parent=51 // pred_region
          %s1042 = sand.u32 %s149, 1
          %s1043 = scalar_lea.sflag [#allocation5], %s1042
          %s1044 = sand.u32 %s149, 1
          %s1045 = scalar_lea.vmem [#allocation6], %s1044
          %1046 = dma.done %s1043, 16
        $region56: #{tpu_custom_call.1} parent=51 // pred_fallthru
          _
      $region52: #{tpu_custom_call.1} parent=5 // pred_fallthru
        _
    $region6: #{tpu_custom_call.1} parent=1 // loop_footer
      %s19 = sadd.s32 1, %s15
    $region7: #{tpu_custom_call.1} parent=1 // loop_footer_branch
      %14 = sbr.rel target = $region3
    $region8: #{tpu_custom_call.1} parent=1 // loop_exit
      _
    %1047 = vsyncpa [#allocation4], 1
    %s1048 = scalar_lea.sflag [#allocation4], 1
    %1049 = vsyncpa %s1048, 1
    %1050 = vsyncpa [#allocation5], 1
    %s1051 = scalar_lea.sflag [#allocation5], 1
    %1052 = vsyncpa %s1051, 1

</llo_original>
